<compile_context>
chip_gen: v7x
topology: tpu7x:2x2x1
jax: 0.10.0
libtpu: 0.0.40
codegen_flags: <defaults>
</compile_context>

<pallas_src>
import functools

import jax
import jax.numpy as jnp
from jax import lax
from jax.experimental import pallas as pl
from jax.experimental.pallas import tpu as pltpu


def _segment_bounds(n_node: int, k: int):
    """Reproduce the PyTorch loop's (start, length) segments statically."""
    step = n_node // k
    if step == 0:
        raise ValueError(f"K={k} must be <= n_node={n_node}")
    segs = []
    i = 0
    while i < n_node:
        if n_node - i < 2 * step:
            segs.append((i, n_node - i))
            break
        segs.append((i, step))
        i += step
    return tuple(segs)


def _readout_kernel(start_ref, end_ref, inv_ref, z_ref, o_ref, acc_ref,
                    *, n_node, tile_n, ragged):
    """One (feature-tile, node-tile) grid step of the selector matmul."""
    n_idx = pl.program_id(1)
    n_last = pl.num_programs(1) - 1

    @pl.when(n_idx == 0)
    def _():
        acc_ref[...] = jnp.zeros_like(acc_ref)

    n_seg = start_ref.shape[0]
    # Global row ids for this node tile, shape (n_seg, tile_n).
    row_ids = (lax.broadcasted_iota(jnp.int32, (n_seg, tile_n), 1)
               + n_idx * tile_n)
    # Membership-only 0/1 selector (exact in any dtype); 1/len applied once
    # at finalize.  Built on the VPU, hidden under the Z-tile DMA.
    sel = jnp.logical_and(row_ids >= start_ref[...],
                          row_ids < end_ref[...]).astype(z_ref.dtype)

    def accumulate(z_tile):
        acc_ref[...] += jnp.dot(sel, z_tile,
                                preferred_element_type=jnp.float32)

    if ragged:
        @pl.when(n_idx < n_last)
        def _():
            accumulate(z_ref[...])

        @pl.when(n_idx == n_last)
        def _():
            # The last Z block runs past n_node; its OOB tail rows contain
            # unspecified data (possibly NaN/Inf) and 0 * NaN = NaN, so zero
            # them explicitly before the matmul.
            rows_valid = n_node - n_idx * tile_n
            rid = lax.broadcasted_iota(jnp.int32, z_ref.shape, 0)
            accumulate(jnp.where(rid < rows_valid, z_ref[...], 0))
    else:
        accumulate(z_ref[...])

    @pl.when(n_idx == n_last)
    def _():
        # Scale segment sums by 1/segment_length exactly once.
        o_ref[...] = (acc_ref[...] * inv_ref[...]).astype(o_ref.dtype)


def readout_pallas(z: jax.Array, k: int, *, max_tile_n: int | None = None) -> jax.Array:
    """Pallas implementation of Readout(K).forward(Z). Returns (1, n_seg*F)."""
    n_node, feat = z.shape
    segments = _segment_bounds(n_node, k)
    n_seg = len(segments)
    dtype_bytes = jnp.dtype(z.dtype).itemsize

    # --- Feature (lane) tiling: >=2 tiles when F >= 256 so the "parallel"
    #     axis can feed both v7x TensorCores (neutral on v5e/v6e).
    if feat % 128 == 0 and feat >= 256:
        target = max(128, (feat // 2) // 128 * 128)
        tile_f = 128
        for cand in range(target, 127, -128):
            if feat % cand == 0:
                tile_f = cand
                break
    else:
        tile_f = feat  # full-F block (valid as a full-dim block for any F)

    # --- Node tiling: largest tile whose two pipelined Z buffers fit a
    #     ~32 MiB budget (safe under v7x's 64 MiB per-core VMEM; large enough
    #     to amortize per-step overhead on v5e/v6e).
    z_budget_bytes = 32 * 1024 * 1024          # total for the 2 Z buffers
    n_cap = ((n_node + 7) // 8) * 8            # multiple-of-8 cover of N
    tile_n = (z_budget_bytes // 2) // max(1, tile_f * dtype_bytes)
    tile_n = min(tile_n, n_cap)
    if max_tile_n is not None:
        tile_n = min(tile_n, max_tile_n)
    if tile_n < n_cap:
        # Round down to 128 (fallback 8) for aligned DMA rows / MXU K dim.
        tile_n = (tile_n // 128) * 128 if tile_n >= 128 else (tile_n // 8) * 8
        tile_n = max(tile_n, 8)

    ragged = (n_node % tile_n) != 0
    grid = (feat // tile_f, pl.cdiv(n_node, tile_n))

    # --- Tiny per-segment tables (replace the old (n_seg, N) HBM selector).
    starts = jnp.asarray([[s] for s, _ in segments], dtype=jnp.int32)
    ends = jnp.asarray([[s + l] for s, l in segments], dtype=jnp.int32)
    inv = jnp.asarray([[1.0 / float(l)] for _, l in segments], dtype=jnp.float32)

    kernel = functools.partial(_readout_kernel,
                               n_node=n_node, tile_n=tile_n, ragged=ragged)

    seg_means = pl.pallas_call(
        kernel,
        out_shape=jax.ShapeDtypeStruct((n_seg, feat), z.dtype),
        grid_spec=pltpu.PrefetchScalarGridSpec(
            num_scalar_prefetch=0,
            grid=grid,
            in_specs=[
                pl.BlockSpec((n_seg, 1), lambda f, n: (0, 0)),        # seg start
                pl.BlockSpec((n_seg, 1), lambda f, n: (0, 0)),        # seg end
                pl.BlockSpec((n_seg, 1), lambda f, n: (0, 0)),        # 1/len
                pl.BlockSpec((tile_n, tile_f), lambda f, n: (n, f)),  # Z tile
            ],
            out_specs=pl.BlockSpec((n_seg, tile_f), lambda f, n: (0, f)),
            scratch_shapes=[pltpu.VMEM((n_seg, tile_f), jnp.float32)],
        ),
        compiler_params=pltpu.CompilerParams(
            dimension_semantics=("parallel", "arbitrary"),
            vmem_limit_bytes=48 * 1024 * 1024,
        ),
        cost_estimate=pl.CostEstimate(
            flops=2 * n_seg * n_node * feat,
            transcendentals=0,
            # Z is read exactly once; per-segment tables are negligible.
            bytes_accessed=int(n_node * feat * dtype_bytes
                               + n_seg * feat * dtype_bytes),
        ),
    )(starts, ends, inv, z)

    # Glue: concatenate segment means into a single (1, n_seg*F) row.
    return seg_means.reshape(1, -1)


def readout_ref(z: jax.Array, k: int) -> jax.Array:
    """Pure-JAX reference mirroring the PyTorch loop."""
    n_node = z.shape[0]
    parts = []
    for start, length in _segment_bounds(n_node, k):
        parts.append(jnp.mean(z[start:start + length], axis=0))
    return jnp.concatenate(parts, axis=0).reshape(1, -1)


def readout(z: jax.Array, k: int) -> jax.Array:
    """Dispatcher: tiny problems skip Pallas (fixed call cost dominates)."""
    n_node, feat = z.shape
    if n_node * feat < 128 * 128:
        return readout_ref(z, k)
    return readout_pallas(z, k)


if __name__ == "__main__":
    key = jax.random.PRNGKey(0)
    k1, k2, k3 = jax.random.split(key, 3)

    # Case 1: F a multiple of 128 (2 feature tiles), uneven last segment.
    Z1 = jax.random.normal(k1, (200, 256), dtype=jnp.float32)
    out1 = jax.block_until_ready(readout_pallas(Z1, 3))
    exp1 = readout_ref(Z1, 3)
    assert out1.shape == (1, len(_segment_bounds(200, 3)) * 256), out1.shape
    assert jnp.allclose(out1, exp1, atol=1e-5, rtol=1e-5), "case1 mismatch"

    # Case 2: force small node tiles -> exercises ragged last-tile masking
    # and multi-step accumulation over the reduction axis.
    out2 = jax.block_until_ready(readout_pallas(Z1, 3, max_tile_n=64))
    assert jnp.allclose(out2, exp1, atol=1e-5, rtol=1e-5), "case2 mismatch"

    # Case 3: F not a multiple of 128 -> full-F block path.
    Z3 = jax.random.normal(k2, (160, 192), dtype=jnp.float32)
    out3 = jax.block_until_ready(readout_pallas(Z3, 4))
    exp3 = readout_ref(Z3, 4)
    assert jnp.allclose(out3, exp3, atol=1e-5, rtol=1e-5), "case3 mismatch"

    # Case 4: tiny shape takes the pure-JAX dispatch path.
    Z4 = jax.random.normal(k3, (16, 32), dtype=jnp.float32)
    out4 = jax.block_until_ready(readout(Z4, 3))
    assert jnp.allclose(out4, readout_ref(Z4, 3), atol=1e-5, rtol=1e-5), "case4 mismatch"

    print("KERNEL_OK")
</pallas_src>

<mosaic_0001>
module attributes {stable_mosaic.version = 11 : i64} {
  func.func @_readout_kernel(%arg0: i32, %arg1: i32, %arg2: memref<3x1xi32, #tpu.memory_space<vmem>>, %arg3: memref<3x1xi32, #tpu.memory_space<vmem>>, %arg4: memref<3x1xf32, #tpu.memory_space<vmem>>, %arg5: memref<200x128xf32, #tpu.memory_space<vmem>>, %arg6: memref<3x128xf32, #tpu.memory_space<vmem>>, %arg7: memref<3x128xf32, #tpu.memory_space<vmem>>) attributes {dimension_semantics = [#tpu.dimension_semantics<parallel>, #tpu.dimension_semantics<arbitrary>], iteration_bounds = array<i64: 2, 1>, scalar_prefetch = 0 : i64, scratch_operands = 1 : i64, tpu.core_type = #tpu.core_type<tc>, window_params = [{pipeline_mode = #tpu.pipeline_mode<synchronous>, transform_indices = @transform_0, window_bounds = array<i64: 3, 1>}, {pipeline_mode = #tpu.pipeline_mode<synchronous>, transform_indices = @transform_1, window_bounds = array<i64: 3, 1>}, {pipeline_mode = #tpu.pipeline_mode<synchronous>, transform_indices = @transform_2, window_bounds = array<i64: 3, 1>}, {transform_indices = @transform_3, window_bounds = array<i64: 200, 128>}, {transform_indices = @transform_4, window_bounds = array<i64: 3, 128>}]} {
    %c0_i32 = arith.constant 0 : i32
    %0 = arith.cmpi eq, %arg1, %c0_i32 : i32
    %1 = arith.extui %0 : i1 to i32
    %c0_i32_0 = arith.constant 0 : i32
    %2 = arith.cmpi ne, %1, %c0_i32_0 : i32
    scf.if %2 {
      %cst_12 = arith.constant 0.000000e+00 : f32
      %24 = vector.broadcast %cst_12 : f32 to vector<3x128xf32>
      %c0_13 = arith.constant 0 : index
      %c0_14 = arith.constant 0 : index
      %25 = vector.load %arg7[%c0_13, %c0_14] : memref<3x128xf32, #tpu.memory_space<vmem>>, vector<3x128xf32>
      tpu.vector_store %arg7[%c0_13, %c0_14], %24 {strides = array<i32>} : memref<3x128xf32, #tpu.memory_space<vmem>>, vector<3x128xf32>,
    } else {
    }
    %3 = tpu.iota {dimensions = array<i32: 1>} : vector<3x200xi32>
    %c200_i32 = arith.constant 200 : i32
    %4 = arith.muli %arg1, %c200_i32 : i32
    %5 = vector.broadcast %4 : i32 to vector<3x200xi32>
    %6 = arith.addi %3, %5 : vector<3x200xi32>
    %c0 = arith.constant 0 : index
    %c0_1 = arith.constant 0 : index
    %7 = vector.load %arg2[%c0, %c0_1] : memref<3x1xi32, #tpu.memory_space<vmem>>, vector<3x1xi32>
    %8 = vector.broadcast %7 : vector<3x1xi32> to vector<3x200xi32>
    %9 = arith.cmpi sge, %6, %8 : vector<3x200xi32>
    %c0_2 = arith.constant 0 : index
    %c0_3 = arith.constant 0 : index
    %10 = vector.load %arg3[%c0_2, %c0_3] : memref<3x1xi32, #tpu.memory_space<vmem>>, vector<3x1xi32>
    %11 = vector.broadcast %10 : vector<3x1xi32> to vector<3x200xi32>
    %12 = arith.cmpi slt, %6, %11 : vector<3x200xi32>
    %13 = arith.andi %9, %12 : vector<3x200xi1>
    %14 = arith.extui %13 : vector<3x200xi1> to vector<3x200xi32>
    %15 = arith.sitofp %14 : vector<3x200xi32> to vector<3x200xf32>
    %c0_4 = arith.constant 0 : index
    %c0_5 = arith.constant 0 : index
    %16 = vector.load %arg5[%c0_4, %c0_5] : memref<200x128xf32, #tpu.memory_space<vmem>>, vector<200x128xf32>
    %c0_6 = arith.constant 0 : index
    %c0_7 = arith.constant 0 : index
    %17 = vector.load %arg7[%c0_6, %c0_7] : memref<3x128xf32, #tpu.memory_space<vmem>>, vector<3x128xf32>
    %cst = arith.constant dense<0.000000e+00> : vector<3x128xf32>
    %18 = tpu.matmul %15, %16, %cst {dimension_numbers = #tpu.dot_dimension_numbers<[1], [0], [0], [1], [0, 0, 1, 1], [], []>} : vector<3x200xf32>, vector<200x128xf32>, vector<3x128xf32> -> vector<3x128xf32>
    %19 = arith.addf %17, %18 : vector<3x128xf32>
    %c0_8 = arith.constant 0 : index
    %c0_9 = arith.constant 0 : index
    %20 = vector.load %arg7[%c0_8, %c0_9] : memref<3x128xf32, #tpu.memory_space<vmem>>, vector<3x128xf32>
    tpu.vector_store %arg7[%c0_8, %c0_9], %19 {strides = array<i32>} : memref<3x128xf32, #tpu.memory_space<vmem>>, vector<3x128xf32>,
    %c0_i32_10 = arith.constant 0 : i32
    %21 = arith.cmpi eq, %arg1, %c0_i32_10 : i32
    %22 = arith.extui %21 : i1 to i32
    %c0_i32_11 = arith.constant 0 : i32
    %23 = arith.cmpi ne, %22, %c0_i32_11 : i32
    scf.if %23 {
      %c0_12 = arith.constant 0 : index
      %c0_13 = arith.constant 0 : index
      %24 = vector.load %arg7[%c0_12, %c0_13] : memref<3x128xf32, #tpu.memory_space<vmem>>, vector<3x128xf32>
      %c0_14 = arith.constant 0 : index
      %c0_15 = arith.constant 0 : index
      %25 = vector.load %arg4[%c0_14, %c0_15] : memref<3x1xf32, #tpu.memory_space<vmem>>, vector<3x1xf32>
      %26 = vector.broadcast %25 : vector<3x1xf32> to vector<3x128xf32>
      %27 = arith.mulf %24, %26 : vector<3x128xf32>
      %c0_16 = arith.constant 0 : index
      %c0_17 = arith.constant 0 : index
      %28 = vector.load %arg6[%c0_16, %c0_17] : memref<3x128xf32, #tpu.memory_space<vmem>>, vector<3x128xf32>
      tpu.vector_store %arg6[%c0_16, %c0_17], %27 {strides = array<i32>} : memref<3x128xf32, #tpu.memory_space<vmem>>, vector<3x128xf32>,
    } else {
    }
    return
  }
  func.func @transform_0(%arg0: i32, %arg1: i32) -> (i32, i32) {
    %c0_i32 = arith.constant 0 : i32
    %c0_i32_0 = arith.constant 0 : i32
    %c0_i32_1 = arith.constant 0 : i32
    return %c0_i32, %c0_i32_0 : i32, i32
  }
  func.func @transform_1(%arg0: i32, %arg1: i32) -> (i32, i32) {
    %c0_i32 = arith.constant 0 : i32
    %c0_i32_0 = arith.constant 0 : i32
    %c0_i32_1 = arith.constant 0 : i32
    return %c0_i32, %c0_i32_0 : i32, i32
  }
  func.func @transform_2(%arg0: i32, %arg1: i32) -> (i32, i32) {
    %c0_i32 = arith.constant 0 : i32
    %c0_i32_0 = arith.constant 0 : i32
    %c0_i32_1 = arith.constant 0 : i32
    return %c0_i32, %c0_i32_0 : i32, i32
  }
  func.func @transform_3(%arg0: i32, %arg1: i32) -> (i32, i32) {
    %c0_i32 = arith.constant 0 : i32
    return %arg1, %arg0 : i32, i32
  }
  func.func @transform_4(%arg0: i32, %arg1: i32) -> (i32, i32) {
    %c0_i32 = arith.constant 0 : i32
    %c0_i32_0 = arith.constant 0 : i32
    return %c0_i32, %arg0 : i32, i32
  }
}

</mosaic_0001>

<llo_original>
// kernel: tpu_custom_call.1
$region0: #{tpu_custom_call.1}
  #allocation0 [shape = 'u32[]', space=smem, size = 0x4, offset = 0x4, fixed_abs, tag = 'smem constant byte address 0x4 - core index']
  #allocation1 [shape = 'u32[144,128]{1,0:T(1,128)}', space=vmem, size = 0x12000, scoped, tag = 'internal scratch']
  #allocation2 [shape = 'f32[3,128]{1,0:T(4,128)}', space=vmem, size = 0x800, scoped, tag = 'scratch operand']
  %s0 = inlined_call_operand.vmem [shape: s32[3,1], index: 0, kind: input, shape index: {}]
  %s1 = inlined_call_operand.vmem [shape: s32[3,1], index: 1, kind: input, shape index: {}]
  %s2 = inlined_call_operand.vmem [shape: f32[3,1], index: 2, kind: input, shape index: {}]
  %s3 = inlined_call_operand.hbm [shape: f32[200,256], index: 3, kind: input, shape index: {}]
  %s4 = inlined_call_operand.hbm [shape: f32[3,256], index: 4, kind: output, shape index: {}]
  %s5 = sld [smem:[#allocation0]]
  $region61: #{tpu_custom_call.1} parent=0
    _
  %s7 = ssub.s32 1, %s5
  %s8 = scalar_select 0, %s7, %s5
  $region1: #{tpu_custom_call.1} parent=0
    #allocation3 [shape = 'u8[204800]{0}', space=vmem, size = 0x32000, scoped, tag = 'input window, operand 3']
    #allocation4 [shape = 's32[2]{0}', space=sflag, size = 0x8, scoped, tag = 'scoped memory for tpu_custom_call.1']
    #allocation5 [shape = 's32[2]{0}', space=sflag, size = 0x8, scoped, tag = 'scoped memory for tpu_custom_call.1']
    #allocation6 [shape = 'u8[4096]{0}', space=vmem, size = 0x1000, scoped, tag = 'output window, operand 0']
    %9 = vsyncpa [#allocation4], 0
    %s10 = scalar_lea.sflag [#allocation4], 1
    %11 = vsyncpa %s10, 0
    %12 = vsyncpa [#allocation5], 0
    %s13 = scalar_lea.sflag [#allocation5], 1
    %14 = vsyncpa %s13, 0
    loop: start=0, step=1, limit=4
    $region2: #{tpu_custom_call.1} parent=1 // loop_pre_header
      _
    $region3: #{tpu_custom_call.1} parent=1 // loop_header
      %s16 = sphi 0, %s20
      %p17 = scmp.ge.s32.totalorder %s16, 4
      %s23 = sphi 0, %s35
      %s24 = sphi 0, %s31
      %s25 = sphi 0, %s23
      %s26 = sphi 0, %s24
      %s27 = sphi 0, %s25
      %s28 = sphi 0, %s26
      %s36 = sphi 0, %s36
      %s38 = sphi 0, %s36
      %s39 = sphi 0, %s38
      %s53 = sphi 0, %s39
      %s57 = sphi 0, %s57
      %s59 = sphi 0, %s57
      %s60 = sphi 0, %s59
      %s74 = sphi 0, %s60
      %s78 = sphi 0, %s78
      %s80 = sphi 0, %s78
      %s81 = sphi 0, %s80
      %s95 = sphi 0, %s81
      %s103 = sphi 0, %s105
      %s106 = sphi 0, %s103
      %s107 = sphi 0, %s106
      %s123 = sphi 0, %s107
      %s129 = sphi 0, %s131
      %s132 = sphi 0, %s129
      %s133 = sphi 0, %s132
      %s149 = sphi 0, %s133
    $region4: #{tpu_custom_call.1} parent=1 // loop_header_branch
      %19 = sbr.rel (%p17) target = $region8
    $region5: #{tpu_custom_call.1} parent=1 // loop_body
      %s21 = ssub.s32 %s16, 1
      %s22 = ssub.s32 %s16, 2
      %s29 = sadd.s32 1, %s24
      %p30 = scmp.ge.s32.totalorder %s29, 1
      %s31 = scalar_select %p30, 0, %s29
      %s32 = sadd.s32 1, %s23
      %s33 = scalar_select %p30, %s32, %s23
      %p34 = scmp.ge.s32.totalorder %s33, 2
      %s35 = scalar_select %p34, 0, %s33
      %s37 = sadd.s32 %s36, 1
      %p40 = scmp.eq.s32.totalorder %s16, 1
      %p41 = scmp.ne.s32.totalorder %s36, %s38
      %p42 = scmp.eq.s32.totalorder %s16, 0
      %p43 = por %p41, %p42
      %p44 = scmp.ne.s32.totalorder %s36, %s38
      %p45 = scmp.eq.s32.totalorder %s21, 1
      %p46 = por %p44, %p45
      %p47 = scmp.ne.s32.totalorder %s38, %s39
      %p48 = scmp.eq.s32.totalorder %s21, 0
      %p49 = por %p47, %p48
      %p50 = scmp.ne.s32.totalorder %s38, %s39
      %p51 = scmp.eq.s32.totalorder %s22, 1
      %p52 = por %p50, %p51
      %p54 = scmp.ne.s32.totalorder %s39, %s53
      %p55 = scmp.eq.s32.totalorder %s22, 0
      %p56 = por %p54, %p55
      %s58 = sadd.s32 %s57, 1
      %p61 = scmp.eq.s32.totalorder %s16, 1
      %p62 = scmp.ne.s32.totalorder %s57, %s59
      %p63 = scmp.eq.s32.totalorder %s16, 0
      %p64 = por %p62, %p63
      %p65 = scmp.ne.s32.totalorder %s57, %s59
      %p66 = scmp.eq.s32.totalorder %s21, 1
      %p67 = por %p65, %p66
      %p68 = scmp.ne.s32.totalorder %s59, %s60
      %p69 = scmp.eq.s32.totalorder %s21, 0
      %p70 = por %p68, %p69
      %p71 = scmp.ne.s32.totalorder %s59, %s60
      %p72 = scmp.eq.s32.totalorder %s22, 1
      %p73 = por %p71, %p72
      %p75 = scmp.ne.s32.totalorder %s60, %s74
      %p76 = scmp.eq.s32.totalorder %s22, 0
      %p77 = por %p75, %p76
      %s79 = sadd.s32 %s78, 1
      %p82 = scmp.eq.s32.totalorder %s16, 1
      %p83 = scmp.ne.s32.totalorder %s78, %s80
      %p84 = scmp.eq.s32.totalorder %s16, 0
      %p85 = por %p83, %p84
      %p86 = scmp.ne.s32.totalorder %s78, %s80
      %p87 = scmp.eq.s32.totalorder %s21, 1
      %p88 = por %p86, %p87
      %p89 = scmp.ne.s32.totalorder %s80, %s81
      %p90 = scmp.eq.s32.totalorder %s21, 0
      %p91 = por %p89, %p90
      %p92 = scmp.ne.s32.totalorder %s80, %s81
      %p93 = scmp.eq.s32.totalorder %s22, 1
      %p94 = por %p92, %p93
      %p96 = scmp.ne.s32.totalorder %s81, %s95
      %p97 = scmp.eq.s32.totalorder %s22, 0
      %p98 = por %p96, %p97
      %s99 = ssub.s32 %s24, %s31
      %s100 = ssub.s32 %s23, %s35
      %s101 = sor.u32 %s99, %s100
      %p102 = scmp.eq.s32.totalorder %s101, 0
      %s104 = sadd.s32 %s103, 1
      %s105 = scalar_select %p102, %s103, %s104
      %p108 = pneg %p102
      %p109 = scmp.eq.s32.totalorder %s16, 1
      %p110 = por %p108, %p109
      %p111 = scmp.ne.s32.totalorder %s103, %s106
      %p112 = scmp.eq.s32.totalorder %s16, 0
      %p113 = por %p111, %p112
      %p114 = scmp.ne.s32.totalorder %s103, %s106
      %p115 = scmp.eq.s32.totalorder %s21, 1
      %p116 = por %p114, %p115
      %p117 = scmp.ne.s32.totalorder %s106, %s107
      %p118 = scmp.eq.s32.totalorder %s21, 0
      %p119 = por %p117, %p118
      %p120 = scmp.ne.s32.totalorder %s106, %s107
      %p121 = scmp.eq.s32.totalorder %s22, 1
      %p122 = por %p120, %p121
      %p124 = scmp.ne.s32.totalorder %s107, %s123
      %p125 = scmp.eq.s32.totalorder %s22, 0
      %p126 = por %p124, %p125
      %s127 = ssub.s32 %s23, %s35
      %p128 = scmp.eq.s32.totalorder %s127, 0
      %s130 = sadd.s32 %s129, 1
      %s131 = scalar_select %p128, %s129, %s130
      %p134 = pneg %p128
      %p135 = scmp.eq.s32.totalorder %s16, 1
      %p136 = por %p134, %p135
      %p137 = scmp.ne.s32.totalorder %s129, %s132
      %p138 = scmp.eq.s32.totalorder %s16, 0
      %p139 = por %p137, %p138
      %p140 = scmp.ne.s32.totalorder %s129, %s132
      %p141 = scmp.eq.s32.totalorder %s21, 1
      %p142 = por %p140, %p141
      %p143 = scmp.ne.s32.totalorder %s132, %s133
      %p144 = scmp.eq.s32.totalorder %s21, 0
      %p145 = por %p143, %p144
      %p146 = scmp.ne.s32.totalorder %s132, %s133
      %p147 = scmp.eq.s32.totalorder %s22, 1
      %p148 = por %p146, %p147
      %p150 = scmp.ne.s32.totalorder %s133, %s149
      %p151 = scmp.eq.s32.totalorder %s22, 0
      %p152 = por %p150, %p151
      %p153 = scmp.le.s32.totalorder 1, %s16
      %p154 = scmp.lt.s32.totalorder %s16, 3
      %p155 = pnand %p153, %p154
      %p156 = pneg %p155
      // Predicated region
      $region9: #{tpu_custom_call.1} parent=5 // pred_check
        _
      $region10: #{tpu_custom_call.1} parent=5 // pred_check_branch
        %158 = sbr.rel (%p155) target = $region12
      $region11: #{tpu_custom_call.1} parent=5 // pred_region
        %s159 = ssub.s32 %s16, 1
        // Predicated region
        $region13: #{tpu_custom_call.1} parent=11 // pred_check
          %p160 = pneg %p49
        $region14: #{tpu_custom_call.1} parent=11 // pred_check_branch
          %162 = sbr.rel (%p160) target = $region16
        $region15: #{tpu_custom_call.1} parent=11 // pred_region
          _
        $region16: #{tpu_custom_call.1} parent=11 // pred_fallthru
          _
        // Predicated region
        $region17: #{tpu_custom_call.1} parent=11 // pred_check
          %p163 = pneg %p70
        $region18: #{tpu_custom_call.1} parent=11 // pred_check_branch
          %165 = sbr.rel (%p163) target = $region20
        $region19: #{tpu_custom_call.1} parent=11 // pred_region
          _
        $region20: #{tpu_custom_call.1} parent=11 // pred_fallthru
          _
        // Predicated region
        $region21: #{tpu_custom_call.1} parent=11 // pred_check
          %p166 = pneg %p91
        $region22: #{tpu_custom_call.1} parent=11 // pred_check_branch
          %168 = sbr.rel (%p166) target = $region24
        $region23: #{tpu_custom_call.1} parent=11 // pred_region
          _
        $region24: #{tpu_custom_call.1} parent=11 // pred_fallthru
          _
      $region12: #{tpu_custom_call.1} parent=5 // pred_fallthru
        _
      %p169 = scmp.lt.s32.totalorder %s16, 2
      // Predicated region
      $region25: #{tpu_custom_call.1} parent=5 // pred_check
        %p170 = pneg %p169
      $region26: #{tpu_custom_call.1} parent=5 // pred_check_branch
        %172 = sbr.rel (%p170) target = $region28
      $region27: #{tpu_custom_call.1} parent=5 // pred_region
        // Predicated region
        $region29: #{tpu_custom_call.1} parent=27 // pred_check
          %p173 = pneg %p113
        $region30: #{tpu_custom_call.1} parent=27 // pred_check_branch
          %175 = sbr.rel (%p173) target = $region32
        $region31: #{tpu_custom_call.1} parent=27 // pred_region
          %s176 = sand.u32 %s103, 1
          %s177 = scalar_lea.sflag [#allocation4], %s176
          %s178 = sand.u32 %s103, 1
          %s179 = smul.addr %s178, 200
          %s180 = scalar_lea.vmem [#allocation3], %s179
          %s181 = smul.u32 25, %s24
          %s183 = ssub.s32 3200, 3200
          %184 = vsyncadd %s177, %s183
          %s185 = smul.addr %s181, 2
          %s186 = sadd.s32 %s23, %s185
          %s187 = smul.addr %s186, 128
          %s188 = scalar_lea.hbm %s3, %s187
          %s189 = sshll.u32 %s180, 4
          %s190 = int_to_ptr.vmem [resolvable:$true] %s189
          %195 = dma.hbm_to_vmem [thread:$0]  %s188, 3200, %s190, %s177, 256, 128, 8
        $region32: #{tpu_custom_call.1} parent=27 // pred_fallthru
          _
      $region28: #{tpu_custom_call.1} parent=5 // pred_fallthru
        _
      %p196 = scmp.le.s32.totalorder 1, %s16
      %p197 = scmp.lt.s32.totalorder %s16, 3
      %p198 = pnand %p196, %p197
      %p199 = pneg %p198
      // Predicated region
      $region33: #{tpu_custom_call.1} parent=5 // pred_check
        _
      $region34: #{tpu_custom_call.1} parent=5 // pred_check_branch
        %201 = sbr.rel (%p198) target = $region36
      $region35: #{tpu_custom_call.1} parent=5 // pred_region
        %s202 = ssub.s32 %s16, 1
        %s203 = sand.u32 %s106, 1
        %s204 = scalar_lea.sflag [#allocation4], %s203
        %s205 = sand.u32 %s106, 1
        %s206 = smul.addr %s205, 200
        %s207 = scalar_lea.vmem [#allocation3], %s206
        // Predicated region
        $region37: #{tpu_custom_call.1} parent=35 // pred_check
          %p208 = pneg %p119
        $region38: #{tpu_custom_call.1} parent=35 // pred_check_branch
          %210 = sbr.rel (%p208) target = $region40
        $region39: #{tpu_custom_call.1} parent=35 // pred_region
          %211 = dma.done %s204, 3200
        $region40: #{tpu_custom_call.1} parent=35 // pred_fallthru
          _
        %p212 = pneg %p49
        %p213 = pneg %p46
        %p214 = pneg %p70
        %p215 = pneg %p67
        %p216 = pneg %p91
        %p217 = pneg %p88
        %s218 = sand.u32 %s106, 1
        %s219 = scalar_lea.sflag [#allocation4], %s218
        %s220 = sand.u32 %s106, 1
        %s221 = smul.addr %s220, 200
        %s222 = scalar_lea.vmem [#allocation3], %s221
        %p223 = pneg %p119
        %p224 = pneg %p116
        %p225 = pneg %p145
        %p226 = pneg %p142
        %s227 = sand.u32 %s132, 1
        %s228 = scalar_lea.sflag [#allocation5], %s227
        %s229 = sand.u32 %s132, 1
        %s230 = smul.addr %s229, 4
        %s231 = scalar_lea.vmem [#allocation6], %s230
        %s232 = smul.u32 25, %s26
        %p233 = scmp.eq.s32.totalorder %s26, 0
        // Predicated region
        $region41: #{tpu_custom_call.1} parent=35 // pred_check
          %p234 = pneg %p233
        $region42: #{tpu_custom_call.1} parent=35 // pred_check_branch
          %236 = sbr.rel (%p234) target = $region44
        $region43: #{tpu_custom_call.1} parent=35 // pred_region
          %237 = vst [vmem:[#allocation2] sm:$0x7] 0.0
        $region44: #{tpu_custom_call.1} parent=35 // pred_fallthru
          _
        %v238 = vlaneseq
        %v239 = vand.u32 %v238, 127
        %v240 = vadd.s32 %v239, 128
        %s241 = smul.u32 %s26, 200
        %v242 = vstv %s241
        %v243 = vadd.s32 %v239, %v242
        %v244 = vadd.s32 %v240, %v242
        %v245 = vld [vmem:[%s0] sm:$0x7]
        %246 = vset.pattern.permute.xlu0 0
        %247 = vperm.xlu0 %246, %v245
        %v248 = vpop.permute.xlu0 %247
        %vm249 = vcmp.ge.s32.totalorder %v243, %v248
        %vm250 = vcmp.ge.s32.totalorder %v244, %v248
        %v251 = vld [vmem:[%s1] sm:$0x7]
        %252 = vset.pattern.permute.xlu0 0
        %253 = vperm.xlu0 %252, %v251
        %v254 = vpop.permute.xlu0 %253
        %vm255 = vcmp.lt.s32.totalorder %v243, %v254
        %vm256 = vcmp.lt.s32.totalorder %v244, %v254
        %vm257 = vmand %vm249, %vm255
        %vm258 = vmand %vm250, %vm256
        %v259 = vsel %vm257, 1, 0
        %v260 = vsel %vm258, 1, 0
        %v261 = vcvt.s32.f32 %v259
        %v262 = vcvt.s32.f32 %v260
        %v263 = vld [vmem:[%s207] sm:$0xff]
        %v264 = vld [vmem:[%s207 + $0x8] sm:$0xff]
        %v265 = vld [vmem:[%s207 + $0x10] sm:$0xff]
        %v266 = vld [vmem:[%s207 + $0x18] sm:$0xff]
        %v267 = vld [vmem:[%s207 + $0x20] sm:$0xff]
        %v268 = vld [vmem:[%s207 + $0x28] sm:$0xff]
        %v269 = vld [vmem:[%s207 + $0x30] sm:$0xff]
        %v270 = vld [vmem:[%s207 + $0x38] sm:$0xff]
        %v271 = vld [vmem:[%s207 + $0x40] sm:$0xff]
        %v272 = vld [vmem:[%s207 + $0x48] sm:$0xff]
        %v273 = vld [vmem:[%s207 + $0x50] sm:$0xff]
        %v274 = vld [vmem:[%s207 + $0x58] sm:$0xff]
        %v275 = vld [vmem:[%s207 + $0x60] sm:$0xff]
        %v276 = vld [vmem:[%s207 + $0x68] sm:$0xff]
        %v277 = vld [vmem:[%s207 + $0x70] sm:$0xff]
        %v278 = vld [vmem:[%s207 + $0x78] sm:$0xff]
        %v279 = vld [vmem:[%s207 + $0x80] sm:$0xff]
        %v280 = vld [vmem:[%s207 + $0x88] sm:$0xff]
        %v281 = vld [vmem:[%s207 + $0x90] sm:$0xff]
        %v282 = vld [vmem:[%s207 + $0x98] sm:$0xff]
        %v283 = vld [vmem:[%s207 + $0xa0] sm:$0xff]
        %v284 = vld [vmem:[%s207 + $0xa8] sm:$0xff]
        %v285 = vld [vmem:[%s207 + $0xb0] sm:$0xff]
        %v286 = vld [vmem:[%s207 + $0xb8] sm:$0xff]
        %v287 = vld [vmem:[%s207 + $0xc0] sm:$0xff]
        %v288 = vld [vmem:[#allocation2] sm:$0x7]
        %vm289 = vcmask 588800
        %v291 = vsel %vm289, %v262, 0
        %293 = vmatprep.subr.mxu0 0.0
        %294 = vmatpush1.msra.mxu0 %v263
        %295 = vmatprep.subr.mxu0 0.0
        %296 = vmatpush1.msra.mxu0 %v264
        %297 = vmatprep.subr.mxu0 0.0
        %298 = vmatpush1.msra.mxu0 %v265
        %299 = vmatprep.subr.mxu0 0.0
        %300 = vmatpush1.msra.mxu0 %v266
        %301 = vmatprep.subr.mxu0 0.0
        %302 = vmatpush1.msra.mxu0 %v267
        %303 = vmatprep.subr.mxu0 0.0
        %304 = vmatpush1.msra.mxu0 %v268
        %305 = vmatprep.subr.mxu0 0.0
        %306 = vmatpush1.msra.mxu0 %v269
        %307 = vmatprep.subr.mxu0 0.0
        %308 = vmatpush1.msra.mxu0 %v270
        %309 = vmatprep.subr.mxu0 0.0
        %310 = vmatpush1.msra.mxu0 %v271
        %311 = vmatprep.subr.mxu0 0.0
        %312 = vmatpush1.msra.mxu0 %v272
        %313 = vmatprep.subr.mxu0 0.0
        %314 = vmatpush1.msra.mxu0 %v273
        %315 = vmatprep.subr.mxu0 0.0
        %316 = vmatpush1.msra.mxu0 %v274
        %317 = vmatprep.subr.mxu0 0.0
        %318 = vmatpush1.msra.mxu0 %v275
        %319 = vmatprep.subr.mxu0 0.0
        %320 = vmatpush1.msra.mxu0 %v276
        %321 = vmatprep.subr.mxu0 0.0
        %322 = vmatpush1.msra.mxu0 %v277
        %323 = vmatprep.subr.mxu0 0.0
        %324 = vmatpush1.msra.mxu0 %v278
        %325 = vmatprep.subr.mxu0 0.0
        %326 = vmatpush1.msra.mxu0 %v279
        %327 = vmatprep.subr.mxu0 0.0
        %328 = vmatpush1.msra.mxu0 %v280
        %329 = vmatprep.subr.mxu0 0.0
        %330 = vmatpush1.msra.mxu0 %v281
        %331 = vmatprep.subr.mxu0 0.0
        %332 = vmatpush1.msra.mxu0 %v282
        %333 = vmatprep.subr.mxu0 0.0
        %334 = vmatpush1.msra.mxu0 %v283
        %335 = vmatprep.subr.mxu0 0.0
        %336 = vmatpush1.msra.mxu0 %v284
        %337 = vmatprep.subr.mxu0 0.0
        %338 = vmatpush1.msra.mxu0 %v285
        %339 = vmatprep.subr.mxu0 0.0
        %340 = vmatpush1.msra.mxu0 %v286
        %341 = vmatprep.subr.mxu0 0.0
        %342 = vmatpush1.msra.mxu0 %v287
        %343 = vmatprep.subr.mxu0 0.0
        %344 = vmatpush1.msra.mxu0 0.0
        %345 = vmatprep.subr.mxu0 0.0
        %346 = vmatpush1.msra.mxu0 0.0
        %347 = vmatprep.subr.mxu0 0.0
        %348 = vmatpush1.msra.mxu0 0.0
        %349 = vmatprep.subr.mxu0 0.0
        %350 = vmatpush1.msra.mxu0 0.0
        %351 = vmatprep.subr.mxu0 0.0
        %352 = vmatpush1.msra.mxu0 0.0
        %353 = vmatprep.subr.mxu0 0.0
        %354 = vmatpush1.msra.mxu0 0.0
        %355 = vmatprep.subr.mxu0 0.0
        %356 = vmatpush1.msra.mxu0 0.0
        %357 = vmatprep.mubr.f32.mxu0 %v291
        %358 = vmatmul.mubr.f32.gmra.mrb[0].mxu0 %v261
        %v359 = vpop.f32.mrb[0].mxu0
        %v360 = vadd.f32 0.0, %v359
        %v361 = vpop.f32.mrb[0].mxu0
        %362 = vdwg.mxu0
        %v363 = vadd.f32 %v288, %v360
        %364 = vst [vmem:[#allocation2] sm:$0x7] %v363
        // Predicated region
        $region45: #{tpu_custom_call.1} parent=35 // pred_check
          %p365 = pneg %p233
        $region46: #{tpu_custom_call.1} parent=35 // pred_check_branch
          %367 = sbr.rel (%p365) target = $region48
        $region47: #{tpu_custom_call.1} parent=35 // pred_region
          %v368 = vld [vmem:[#allocation2] sm:$0x7]
          %v369 = vld [vmem:[%s2] sm:$0x7]
          %371 = vset.pattern.permute.xlu0 0
          %372 = vperm.xlu0 %371, %v369
          %v373 = vpop.permute.xlu0 %372
          %v375 = vmul.f32 %v368, %v373
          %376 = vst [vmem:[%s231] sm:$0x7] %v375
        $region48: #{tpu_custom_call.1} parent=35 // pred_fallthru
          _
        %s377 = sand.u32 %s132, 1
        %s378 = scalar_lea.sflag [#allocation5], %s377
        %s379 = sand.u32 %s132, 1
        %s380 = smul.addr %s379, 4
        %s381 = scalar_lea.vmem [#allocation6], %s380
        // Predicated region
        $region49: #{tpu_custom_call.1} parent=35 // pred_check
          %p382 = pneg %p142
        $region50: #{tpu_custom_call.1} parent=35 // pred_check_branch
          %384 = sbr.rel (%p382) target = $region52
        $region51: #{tpu_custom_call.1} parent=35 // pred_region
          %s386 = ssub.s32 64, 64
          %387 = vsyncadd %s378, %s386
          %s388 = smul.addr %s25, 64
          %s389 = scalar_lea.hbm %s4, %s388
          %s391 = sshll.u32 %s381, 4
          %s392 = int_to_ptr.vmem [resolvable:$true] %s391
          %394 = dma.vmem_to_hbm [thread:$0]  %s392, 64, %s389, %s378
        $region52: #{tpu_custom_call.1} parent=35 // pred_fallthru
          _
      $region36: #{tpu_custom_call.1} parent=5 // pred_fallthru
        _
      %p395 = scmp.le.s32.totalorder 2, %s16
      // Predicated region
      $region53: #{tpu_custom_call.1} parent=5 // pred_check
        %p396 = pneg %p395
      $region54: #{tpu_custom_call.1} parent=5 // pred_check_branch
        %398 = sbr.rel (%p396) target = $region56
      $region55: #{tpu_custom_call.1} parent=5 // pred_region
        %s399 = ssub.s32 %s16, 2
        // Predicated region
        $region57: #{tpu_custom_call.1} parent=55 // pred_check
          %p400 = pneg %p148
        $region58: #{tpu_custom_call.1} parent=55 // pred_check_branch
          %402 = sbr.rel (%p400) target = $region60
        $region59: #{tpu_custom_call.1} parent=55 // pred_region
          %s403 = sand.u32 %s133, 1
          %s404 = scalar_lea.sflag [#allocation5], %s403
          %s405 = sand.u32 %s133, 1
          %s406 = smul.addr %s405, 4
          %s407 = scalar_lea.vmem [#allocation6], %s406
          %408 = dma.done %s404, 64
        $region60: #{tpu_custom_call.1} parent=55 // pred_fallthru
          _
      $region56: #{tpu_custom_call.1} parent=5 // pred_fallthru
        _
    $region6: #{tpu_custom_call.1} parent=1 // loop_footer
      %s20 = sadd.s32 1, %s16
    $region7: #{tpu_custom_call.1} parent=1 // loop_footer_branch
      %15 = sbr.rel target = $region3
    $region8: #{tpu_custom_call.1} parent=1 // loop_exit
      _
    %409 = vsyncpa [#allocation4], 1
    %s410 = scalar_lea.sflag [#allocation4], 1
    %411 = vsyncpa %s410, 1
    %412 = vsyncpa [#allocation5], 1
    %s413 = scalar_lea.sflag [#allocation5], 1
    %414 = vsyncpa %s413, 1

</llo_original>
